<compile_context>
chip_gen: v6e
topology: v6e:2x2x1
jax: 0.10.0
libtpu: 0.0.40
codegen_flags: <defaults>
</compile_context>

<pallas_src>
import jax
import jax.numpy as jnp
from jax.experimental import pallas as pl
from jax.experimental.pallas import tpu as pltpu


def _round_up(x, m):
    return ((x + m - 1) // m) * m


def _fused_head_kernel(mean_ref, tfidf_ref, wp_ref, bp_ref,
                       wch_ref, wct_ref, bc_ref, out_ref):
    """BERT pooler (dense + tanh) + classifier on concat([pooled, tfidf])."""
    # Pooler: tanh(mean @ Wp + bp). bf16 operands -> MXU, f32 accumulation.
    pooled = jnp.tanh(
        jnp.dot(mean_ref[...], wp_ref[...],
                preferred_element_type=jnp.float32)
        + bp_ref[...])                                         # (Bt, Hp) f32

    # TODO(synk): Dropout(p=0.3) is identity here (eval-mode semantics);
    # training would need pltpu.prng_seed / prng_random_bits masking.

    # Classifier on concat([pooled, tfidf]) realized as a split matmul:
    #   logits = pooled @ Wc_h + tfidf @ Wc_t + bc
    logits = (
        jnp.dot(pooled.astype(jnp.bfloat16), wch_ref[...],
                preferred_element_type=jnp.float32)
        + jnp.dot(tfidf_ref[...], wct_ref[...],
                  preferred_element_type=jnp.float32)
        + bc_ref[...])                                         # (Bt, Cp) f32
    out_ref[...] = logits.astype(out_ref.dtype)


def bert_tfidf_classifier(input_ids, attention_mask, tfidf_vector, params):
    emb_table = params["emb_table"]          # (V, H) f32
    B, _ = input_ids.shape
    H = emb_table.shape[1]
    T = tfidf_vector.shape[1]
    C = params["bc"].shape[1]

    # ---- stand-in BERT encoder (XLA glue; no (B,S,H) HBM round-trip) ----
    # TODO(synk): real HF BERT pooler_output = tanh(W @ hidden_state[:, 0]);
    # with no injected encoder, a masked mean over token embeddings stands in
    # for the encoder's per-sequence summary.
    mask = attention_mask.astype(jnp.float32)                        # (B, S)
    summed = jnp.einsum("bs,bsh->bh", mask, emb_table[input_ids])    # (B, H)
    denom = jnp.maximum(jnp.sum(mask, axis=1, keepdims=True), 1e-9)
    mean = summed / denom                                            # (B, H) f32

    # ---- pad to TPU-friendly shapes ----
    Hp = _round_up(H, 128)                       # lane-dense contraction dims
    Tp = _round_up(T, 128)
    Cp = _round_up(C, 128)                       # lane-dense output / weights
    Bt = 128 if B >= 128 else _round_up(B, 8)    # MXU M tile (multiple of 8)
    Bp = _round_up(B, Bt)

    def pad2(x, rows, cols, dtype):
        x = x.astype(jnp.float32)
        return jnp.pad(x, ((0, rows - x.shape[0]),
                           (0, cols - x.shape[1]))).astype(dtype)

    mean_p  = pad2(mean, Bp, Hp, jnp.bfloat16)             # matmul lhs -> bf16
    tfidf_p = pad2(tfidf_vector, Bp, Tp, jnp.bfloat16)
    wp_p    = pad2(params["Wp"],   Hp, Hp, jnp.bfloat16)
    bp_p    = pad2(params["bp"],   1,  Hp, jnp.float32)    # bias added in f32
    wch_p   = pad2(params["Wc_h"], Hp, Cp, jnp.bfloat16)
    wct_p   = pad2(params["Wc_t"], Tp, Cp, jnp.bfloat16)
    bc_p    = pad2(params["bc"],   1,  Cp, jnp.float32)

    grid = (Bp // Bt,)

    # Batch-tiled activations/output; weights keep a constant index_map so
    # they stay resident in VMEM and are DMA'd exactly once.
    def batch_spec(cols):
        return pl.BlockSpec((Bt, cols), lambda i: (i, 0))

    def weight_spec(rows, cols):
        return pl.BlockSpec((rows, cols), lambda i: (0, 0))

    cost = pl.CostEstimate(
        flops=2 * Bp * Hp * Hp + 2 * Bp * (Hp + Tp) * Cp,
        transcendentals=Bp * Hp,                                  # tanh
        bytes_accessed=(Bp * Hp + Bp * Tp + Hp * Hp + Hp * Cp + Tp * Cp) * 2
                       + (Hp + Cp) * 4 + Bp * Cp * 4)

    logits_p = pl.pallas_call(
        _fused_head_kernel,
        out_shape=jax.ShapeDtypeStruct((Bp, Cp), jnp.float32),
        grid=grid,
        in_specs=[
            batch_spec(Hp),          # mean   (Bp, Hp) bf16
            batch_spec(Tp),          # tfidf  (Bp, Tp) bf16
            weight_spec(Hp, Hp),     # Wp
            weight_spec(1, Hp),      # bp
            weight_spec(Hp, Cp),     # Wc_h
            weight_spec(Tp, Cp),     # Wc_t
            weight_spec(1, Cp),      # bc
        ],
        out_specs=batch_spec(Cp),
        compiler_params=pltpu.CompilerParams(
            dimension_semantics=("parallel",)),   # v7x: B tiles across 2 TCs
        cost_estimate=cost,
    )(mean_p, tfidf_p, wp_p, bp_p, wch_p, wct_p, bc_p)

    return logits_p[:B, :C]


def init_params(key, vocab, hidden, tfidf_size, num_classes):
    ks = jax.random.split(key, 3)
    scale = 0.02
    emb_table = scale * jax.random.normal(ks[0], (vocab, hidden), jnp.float32)
    Wp = scale * jax.random.normal(ks[1], (hidden, hidden), jnp.float32)
    bp = jnp.zeros((1, hidden), jnp.float32)
    # classifier weight (C, H+T) in torch convention -> split & transpose
    Wc = scale * jax.random.normal(ks[2], (num_classes, hidden + tfidf_size),
                                   jnp.float32)
    Wc_h = Wc[:, :hidden].T                 # (H, C)
    Wc_t = Wc[:, hidden:].T                 # (T, C)
    bc = jnp.zeros((1, num_classes), jnp.float32)
    return {"emb_table": emb_table, "Wp": Wp, "bp": bp,
            "Wc_h": Wc_h, "Wc_t": Wc_t, "bc": bc}


if __name__ == "__main__":
    B, S, H, T, C, V = 2, 8, 32, 32, 8, 64

    key = jax.random.PRNGKey(0)
    k_ids, k_tfidf, k_params = jax.random.split(key, 3)

    input_ids = jax.random.randint(k_ids, (B, S), 0, V, dtype=jnp.int32)
    attention_mask = jnp.ones((B, S), jnp.int32).at[:, -2:].set(0)  # pad last 2
    tfidf_vector = jax.random.uniform(k_tfidf, (B, T), jnp.float32)

    params = init_params(k_params, V, H, T, C)

    fwd = jax.jit(bert_tfidf_classifier)
    logits = fwd(input_ids, attention_mask, tfidf_vector, params)
    jax.block_until_ready(logits)

    assert logits.shape == (B, C) and logits.dtype == jnp.float32
    print("KERNEL_OK")
</pallas_src>

<mosaic_0001>
module attributes {stable_mosaic.version = 11 : i64} {
  func.func @_fused_head_kernel(%arg0: i32, %arg1: memref<8x128xbf16, #tpu.memory_space<vmem>>, %arg2: memref<8x128xbf16, #tpu.memory_space<vmem>>, %arg3: memref<128x128xbf16, #tpu.memory_space<vmem>>, %arg4: memref<1x128xf32, #tpu.memory_space<vmem>>, %arg5: memref<128x128xbf16, #tpu.memory_space<vmem>>, %arg6: memref<128x128xbf16, #tpu.memory_space<vmem>>, %arg7: memref<1x128xf32, #tpu.memory_space<vmem>>, %arg8: memref<8x128xf32, #tpu.memory_space<vmem>>) attributes {dimension_semantics = [#tpu.dimension_semantics<parallel>], iteration_bounds = array<i64: 1>, scalar_prefetch = 0 : i64, scratch_operands = 0 : i64, tpu.core_type = #tpu.core_type<tc>, window_params = [{transform_indices = @transform_0, window_bounds = array<i64: 8, 128>}, {transform_indices = @transform_1, window_bounds = array<i64: 8, 128>}, {pipeline_mode = #tpu.pipeline_mode<synchronous>, transform_indices = @transform_2, window_bounds = array<i64: 128, 128>}, {pipeline_mode = #tpu.pipeline_mode<synchronous>, transform_indices = @transform_3, window_bounds = array<i64: 1, 128>}, {pipeline_mode = #tpu.pipeline_mode<synchronous>, transform_indices = @transform_4, window_bounds = array<i64: 128, 128>}, {pipeline_mode = #tpu.pipeline_mode<synchronous>, transform_indices = @transform_5, window_bounds = array<i64: 128, 128>}, {pipeline_mode = #tpu.pipeline_mode<synchronous>, transform_indices = @transform_6, window_bounds = array<i64: 1, 128>}, {transform_indices = @transform_7, window_bounds = array<i64: 8, 128>}]} {
    %c0 = arith.constant 0 : index
    %c0_0 = arith.constant 0 : index
    %0 = vector.load %arg1[%c0, %c0_0] : memref<8x128xbf16, #tpu.memory_space<vmem>>, vector<8x128xbf16>
    %c0_1 = arith.constant 0 : index
    %c0_2 = arith.constant 0 : index
    %1 = vector.load %arg3[%c0_1, %c0_2] : memref<128x128xbf16, #tpu.memory_space<vmem>>, vector<128x128xbf16>
    %cst = arith.constant dense<0.000000e+00> : vector<8x128xf32>
    %2 = tpu.matmul %0, %1, %cst {dimension_numbers = #tpu.dot_dimension_numbers<[1], [0], [0], [1], [0, 0, 1, 1], [], []>} : vector<8x128xbf16>, vector<128x128xbf16>, vector<8x128xf32> -> vector<8x128xf32>
    %c0_3 = arith.constant 0 : index
    %c0_4 = arith.constant 0 : index
    %3 = vector.load %arg4[%c0_3, %c0_4] : memref<1x128xf32, #tpu.memory_space<vmem>>, vector<1x128xf32>
    %4 = vector.broadcast %3 : vector<1x128xf32> to vector<8x128xf32>
    %5 = arith.addf %2, %4 : vector<8x128xf32>
    %6 = math.tanh %5 : vector<8x128xf32>
    %7 = arith.truncf %6 : vector<8x128xf32> to vector<8x128xbf16>
    %c0_5 = arith.constant 0 : index
    %c0_6 = arith.constant 0 : index
    %8 = vector.load %arg5[%c0_5, %c0_6] : memref<128x128xbf16, #tpu.memory_space<vmem>>, vector<128x128xbf16>
    %cst_7 = arith.constant dense<0.000000e+00> : vector<8x128xf32>
    %9 = tpu.matmul %7, %8, %cst_7 {dimension_numbers = #tpu.dot_dimension_numbers<[1], [0], [0], [1], [0, 0, 1, 1], [], []>} : vector<8x128xbf16>, vector<128x128xbf16>, vector<8x128xf32> -> vector<8x128xf32>
    %c0_8 = arith.constant 0 : index
    %c0_9 = arith.constant 0 : index
    %10 = vector.load %arg2[%c0_8, %c0_9] : memref<8x128xbf16, #tpu.memory_space<vmem>>, vector<8x128xbf16>
    %c0_10 = arith.constant 0 : index
    %c0_11 = arith.constant 0 : index
    %11 = vector.load %arg6[%c0_10, %c0_11] : memref<128x128xbf16, #tpu.memory_space<vmem>>, vector<128x128xbf16>
    %cst_12 = arith.constant dense<0.000000e+00> : vector<8x128xf32>
    %12 = tpu.matmul %10, %11, %cst_12 {dimension_numbers = #tpu.dot_dimension_numbers<[1], [0], [0], [1], [0, 0, 1, 1], [], []>} : vector<8x128xbf16>, vector<128x128xbf16>, vector<8x128xf32> -> vector<8x128xf32>
    %13 = arith.addf %9, %12 : vector<8x128xf32>
    %c0_13 = arith.constant 0 : index
    %c0_14 = arith.constant 0 : index
    %14 = vector.load %arg7[%c0_13, %c0_14] : memref<1x128xf32, #tpu.memory_space<vmem>>, vector<1x128xf32>
    %15 = vector.broadcast %14 : vector<1x128xf32> to vector<8x128xf32>
    %16 = arith.addf %13, %15 : vector<8x128xf32>
    %c0_15 = arith.constant 0 : index
    %c0_16 = arith.constant 0 : index
    %17 = vector.load %arg8[%c0_15, %c0_16] : memref<8x128xf32, #tpu.memory_space<vmem>>, vector<8x128xf32>
    tpu.vector_store %arg8[%c0_15, %c0_16], %16 {strides = array<i32>} : memref<8x128xf32, #tpu.memory_space<vmem>>, vector<8x128xf32>,
    return
  }
  func.func @transform_0(%arg0: i32) -> (i32, i32) {
    %c0_i32 = arith.constant 0 : i32
    %c0_i32_0 = arith.constant 0 : i32
    return %arg0, %c0_i32 : i32, i32
  }
  func.func @transform_1(%arg0: i32) -> (i32, i32) {
    %c0_i32 = arith.constant 0 : i32
    %c0_i32_0 = arith.constant 0 : i32
    return %arg0, %c0_i32 : i32, i32
  }
  func.func @transform_2(%arg0: i32) -> (i32, i32) {
    %c0_i32 = arith.constant 0 : i32
    %c0_i32_0 = arith.constant 0 : i32
    %c0_i32_1 = arith.constant 0 : i32
    return %c0_i32, %c0_i32_0 : i32, i32
  }
  func.func @transform_3(%arg0: i32) -> (i32, i32) {
    %c0_i32 = arith.constant 0 : i32
    %c0_i32_0 = arith.constant 0 : i32
    %c0_i32_1 = arith.constant 0 : i32
    return %c0_i32, %c0_i32_0 : i32, i32
  }
  func.func @transform_4(%arg0: i32) -> (i32, i32) {
    %c0_i32 = arith.constant 0 : i32
    %c0_i32_0 = arith.constant 0 : i32
    %c0_i32_1 = arith.constant 0 : i32
    return %c0_i32, %c0_i32_0 : i32, i32
  }
  func.func @transform_5(%arg0: i32) -> (i32, i32) {
    %c0_i32 = arith.constant 0 : i32
    %c0_i32_0 = arith.constant 0 : i32
    %c0_i32_1 = arith.constant 0 : i32
    return %c0_i32, %c0_i32_0 : i32, i32
  }
  func.func @transform_6(%arg0: i32) -> (i32, i32) {
    %c0_i32 = arith.constant 0 : i32
    %c0_i32_0 = arith.constant 0 : i32
    %c0_i32_1 = arith.constant 0 : i32
    return %c0_i32, %c0_i32_0 : i32, i32
  }
  func.func @transform_7(%arg0: i32) -> (i32, i32) {
    %c0_i32 = arith.constant 0 : i32
    %c0_i32_0 = arith.constant 0 : i32
    return %arg0, %c0_i32 : i32, i32
  }
}

</mosaic_0001>

<llo_original>
// kernel: bert_tfidf_classifier.1
$region0: #{bert_tfidf_classifier.1}
  #allocation0 [shape = 'u32[]', space=smem, size = 0x4, offset = 0x4, fixed_abs, tag = 'smem constant byte address 0x4 - core index']
  #allocation1 [shape = 'u32[144,128]{1,0:T(1,128)}', space=vmem, size = 0x12000, scoped, tag = 'internal scratch']
  %s0 = inlined_call_operand.vmem [shape: bf16[8,128], index: 0, kind: input, shape index: {}]
  %s1 = inlined_call_operand.vmem [shape: bf16[8,128], index: 1, kind: input, shape index: {}]
  %s2 = inlined_call_operand.vmem [shape: bf16[128,128], index: 2, kind: input, shape index: {}]
  %s3 = inlined_call_operand.vmem [shape: f32[1,128], index: 3, kind: input, shape index: {}]
  %s4 = inlined_call_operand.vmem [shape: bf16[128,128], index: 4, kind: input, shape index: {}]
  %s5 = inlined_call_operand.vmem [shape: bf16[128,128], index: 5, kind: input, shape index: {}]
  %s6 = inlined_call_operand.vmem [shape: f32[1,128], index: 6, kind: input, shape index: {}]
  %s7 = inlined_call_operand.vmem [shape: f32[8,128], index: 7, kind: output, shape index: {}]
  %s8 = sld [smem:[#allocation0]]
  $region38: #{bert_tfidf_classifier.1} parent=0
    _
  %s10 = ssub.s32 1, %s8
  %s11 = scalar_select 0, %s10, %s8
  // Predicated region
  $region2: #{bert_tfidf_classifier.1} parent=0 // pred_check
    _
  $region3: #{bert_tfidf_classifier.1} parent=0 // pred_check_branch
    %13 = sbr.rel (0) target = $region5
  $region4: #{bert_tfidf_classifier.1} parent=0 // pred_region
    _
  $region5: #{bert_tfidf_classifier.1} parent=0 // pred_fallthru
    _
  // Predicated region
  $region6: #{bert_tfidf_classifier.1} parent=0 // pred_check
    _
  $region7: #{bert_tfidf_classifier.1} parent=0 // pred_check_branch
    %15 = sbr.rel (0) target = $region9
  $region8: #{bert_tfidf_classifier.1} parent=0 // pred_region
    _
  $region9: #{bert_tfidf_classifier.1} parent=0 // pred_fallthru
    _
  // Predicated region
  $region10: #{bert_tfidf_classifier.1} parent=0 // pred_check
    _
  $region11: #{bert_tfidf_classifier.1} parent=0 // pred_check_branch
    %17 = sbr.rel (0) target = $region13
  $region12: #{bert_tfidf_classifier.1} parent=0 // pred_region
    _
  $region13: #{bert_tfidf_classifier.1} parent=0 // pred_fallthru
    _
  // Predicated region
  $region14: #{bert_tfidf_classifier.1} parent=0 // pred_check
    _
  $region15: #{bert_tfidf_classifier.1} parent=0 // pred_check_branch
    %19 = sbr.rel (0) target = $region17
  $region16: #{bert_tfidf_classifier.1} parent=0 // pred_region
    _
  $region17: #{bert_tfidf_classifier.1} parent=0 // pred_fallthru
    _
  // Predicated region
  $region18: #{bert_tfidf_classifier.1} parent=0 // pred_check
    _
  $region19: #{bert_tfidf_classifier.1} parent=0 // pred_check_branch
    %21 = sbr.rel (0) target = $region21
  $region20: #{bert_tfidf_classifier.1} parent=0 // pred_region
    _
  $region21: #{bert_tfidf_classifier.1} parent=0 // pred_fallthru
    _
  // Predicated region
  $region22: #{bert_tfidf_classifier.1} parent=0 // pred_check
    _
  $region23: #{bert_tfidf_classifier.1} parent=0 // pred_check_branch
    %23 = sbr.rel (0) target = $region25
  $region24: #{bert_tfidf_classifier.1} parent=0 // pred_region
    _
  $region25: #{bert_tfidf_classifier.1} parent=0 // pred_fallthru
    _
  // Predicated region
  $region26: #{bert_tfidf_classifier.1} parent=0 // pred_check
    _
  $region27: #{bert_tfidf_classifier.1} parent=0 // pred_check_branch
    %25 = sbr.rel (0) target = $region29
  $region28: #{bert_tfidf_classifier.1} parent=0 // pred_region
    _
  $region29: #{bert_tfidf_classifier.1} parent=0 // pred_fallthru
    _
  %v27 = vld [vmem:[%s0] sm:$0xf]
  %v28 = vld [vmem:[%s2] sm:$0xf]
  %v29 = vld [vmem:[%s2 + $0x4] sm:$0xf]
  %v30 = vld [vmem:[%s2 + $0x8] sm:$0xf]
  %v31 = vld [vmem:[%s2 + $0xc] sm:$0xf]
  %v32 = vld [vmem:[%s2 + $0x10] sm:$0xf]
  %v33 = vld [vmem:[%s2 + $0x14] sm:$0xf]
  %v34 = vld [vmem:[%s2 + $0x18] sm:$0xf]
  %v35 = vld [vmem:[%s2 + $0x1c] sm:$0xf]
  %v36 = vld [vmem:[%s2 + $0x20] sm:$0xf]
  %v37 = vld [vmem:[%s2 + $0x24] sm:$0xf]
  %v38 = vld [vmem:[%s2 + $0x28] sm:$0xf]
  %v39 = vld [vmem:[%s2 + $0x2c] sm:$0xf]
  %v40 = vld [vmem:[%s2 + $0x30] sm:$0xf]
  %v41 = vld [vmem:[%s2 + $0x34] sm:$0xf]
  %v42 = vld [vmem:[%s2 + $0x38] sm:$0xf]
  %v43 = vld [vmem:[%s2 + $0x3c] sm:$0xf]
  %v44 = vld [vmem:[%s3] sm:$0x1]
  %v46 = vlaneseq
  %v47 = vshrl.u32 %v46, 7
  %v48 = vsub.s32 0, %v47
  %v49 = vrot.slane %v44, %v48
  %v67 = vunpack.c.l.b16 %v28
  %v68 = vunpack.c.l.b16 %v29
  %v69 = vunpack.c.l.b16 %v30
  %v70 = vunpack.c.l.b16 %v31
  %v71 = vunpack.c.l.b16 %v32
  %v72 = vunpack.c.l.b16 %v33
  %v73 = vunpack.c.l.b16 %v34
  %v74 = vunpack.c.l.b16 %v35
  %v75 = vunpack.c.l.b16 %v36
  %v76 = vunpack.c.l.b16 %v37
  %v77 = vunpack.c.l.b16 %v38
  %v78 = vunpack.c.l.b16 %v39
  %v79 = vunpack.c.l.b16 %v40
  %v80 = vunpack.c.l.b16 %v41
  %v81 = vunpack.c.l.b16 %v42
  %v82 = vunpack.c.l.b16 %v43
  %v83 = vpack.c.b16 %v68, %v67
  %v84 = vpack.c.b16 %v70, %v69
  %v85 = vpack.c.b16 %v72, %v71
  %v86 = vpack.c.b16 %v74, %v73
  %v87 = vpack.c.b16 %v76, %v75
  %v88 = vpack.c.b16 %v78, %v77
  %v89 = vpack.c.b16 %v80, %v79
  %v90 = vpack.c.b16 %v82, %v81
  %99 = vmatprep.subr.bf16.mxu0 0
  %100 = vmatpush1.bf16.msra.mxu0 %v90
  %101 = vmatprep.subr.bf16.mxu0 0
  %102 = vmatpush1.bf16.msra.mxu0 %v89
  %103 = vmatprep.subr.bf16.mxu0 0
  %104 = vmatpush1.bf16.msra.mxu0 %v88
  %105 = vmatprep.subr.bf16.mxu0 0
  %106 = vmatpush1.bf16.msra.mxu0 %v87
  %107 = vmatprep.subr.bf16.mxu0 0
  %108 = vmatpush1.bf16.msra.mxu0 %v86
  %109 = vmatprep.subr.bf16.mxu0 0
  %110 = vmatpush1.bf16.msra.mxu0 %v85
  %111 = vmatprep.subr.bf16.mxu0 0
  %112 = vmatpush1.bf16.msra.mxu0 %v84
  %113 = vmatprep.subr.bf16.mxu0 0
  %114 = vmatpush1.bf16.msra.mxu0 %v83
  %115 = vmatprep.subr.bf16.mxu0 0
  %116 = vmatpush2.bf16.msra.mxu0 0
  %117 = vmatprep.subr.bf16.mxu0 0
  %118 = vmatpush2.bf16.msra.mxu0 0
  %119 = vmatprep.subr.bf16.mxu0 0
  %120 = vmatpush2.bf16.msra.mxu0 0
  %121 = vmatprep.subr.bf16.mxu0 0
  %122 = vmatpush2.bf16.msra.mxu0 0
  %123 = vmatprep.subr.bf16.mxu0 0
  %124 = vmatpush2.bf16.msra.mxu0 0
  %125 = vmatprep.subr.bf16.mxu0 0
  %126 = vmatpush2.bf16.msra.mxu0 0
  %127 = vmatprep.subr.bf16.mxu0 0
  %128 = vmatpush2.bf16.msra.mxu0 0
  %129 = vmatprep.subr.bf16.mxu0 0
  %130 = vmatpush2.bf16.msra.mxu0 0
  %131 = vmatprep.mubr.bf16.mxu0 0
  %132 = vmatmul.mubr.bf16.gmra.mxu0 %v27
  %v133 = vpop.f32.mrf.mxu0
  %v134 = vadd.f32 %v49, %v133
  %v135 = vpop.f32.mrf.mxu0
  %v136 = vpop.f32.mrf.mxu0
  %v137 = vpop.f32.mrf.mxu0
  %138 = vdwg.mxu0
  %v139 = vtanh.pop %v134
  %v140 = vpack.c.bf16 %v139, %v139
  %v141 = vld [vmem:[%s4] sm:$0xf]
  %v142 = vld [vmem:[%s4 + $0x4] sm:$0xf]
  %v143 = vld [vmem:[%s4 + $0x8] sm:$0xf]
  %v144 = vld [vmem:[%s4 + $0xc] sm:$0xf]
  %v145 = vld [vmem:[%s4 + $0x10] sm:$0xf]
  %v146 = vld [vmem:[%s4 + $0x14] sm:$0xf]
  %v147 = vld [vmem:[%s4 + $0x18] sm:$0xf]
  %v148 = vld [vmem:[%s4 + $0x1c] sm:$0xf]
  %v149 = vld [vmem:[%s4 + $0x20] sm:$0xf]
  %v150 = vld [vmem:[%s4 + $0x24] sm:$0xf]
  %v151 = vld [vmem:[%s4 + $0x28] sm:$0xf]
  %v152 = vld [vmem:[%s4 + $0x2c] sm:$0xf]
  %v153 = vld [vmem:[%s4 + $0x30] sm:$0xf]
  %v154 = vld [vmem:[%s4 + $0x34] sm:$0xf]
  %v155 = vld [vmem:[%s4 + $0x38] sm:$0xf]
  %v156 = vld [vmem:[%s4 + $0x3c] sm:$0xf]
  %v157 = vld [vmem:[%s1] sm:$0xf]
  %v158 = vld [vmem:[%s5] sm:$0xf]
  %v159 = vld [vmem:[%s5 + $0x4] sm:$0xf]
  %v160 = vld [vmem:[%s5 + $0x8] sm:$0xf]
  %v161 = vld [vmem:[%s5 + $0xc] sm:$0xf]
  %v162 = vld [vmem:[%s5 + $0x10] sm:$0xf]
  %v163 = vld [vmem:[%s5 + $0x14] sm:$0xf]
  %v164 = vld [vmem:[%s5 + $0x18] sm:$0xf]
  %v165 = vld [vmem:[%s5 + $0x1c] sm:$0xf]
  %v166 = vld [vmem:[%s5 + $0x20] sm:$0xf]
  %v167 = vld [vmem:[%s5 + $0x24] sm:$0xf]
  %v168 = vld [vmem:[%s5 + $0x28] sm:$0xf]
  %v169 = vld [vmem:[%s5 + $0x2c] sm:$0xf]
  %v170 = vld [vmem:[%s5 + $0x30] sm:$0xf]
  %v171 = vld [vmem:[%s5 + $0x34] sm:$0xf]
  %v172 = vld [vmem:[%s5 + $0x38] sm:$0xf]
  %v173 = vld [vmem:[%s5 + $0x3c] sm:$0xf]
  %v190 = vunpack.c.l.b16 %v158
  %v191 = vunpack.c.l.b16 %v159
  %v192 = vunpack.c.l.b16 %v160
  %v193 = vunpack.c.l.b16 %v161
  %v194 = vunpack.c.l.b16 %v162
  %v195 = vunpack.c.l.b16 %v163
  %v196 = vunpack.c.l.b16 %v164
  %v197 = vunpack.c.l.b16 %v165
  %v198 = vunpack.c.l.b16 %v166
  %v199 = vunpack.c.l.b16 %v167
  %v200 = vunpack.c.l.b16 %v168
  %v201 = vunpack.c.l.b16 %v169
  %v202 = vunpack.c.l.b16 %v170
  %v203 = vunpack.c.l.b16 %v171
  %v204 = vunpack.c.l.b16 %v172
  %v205 = vunpack.c.l.b16 %v173
  %v206 = vpack.c.b16 %v191, %v190
  %v207 = vpack.c.b16 %v193, %v192
  %v208 = vpack.c.b16 %v195, %v194
  %v209 = vpack.c.b16 %v197, %v196
  %v210 = vpack.c.b16 %v199, %v198
  %v211 = vpack.c.b16 %v201, %v200
  %v212 = vpack.c.b16 %v203, %v202
  %v213 = vpack.c.b16 %v205, %v204
  %222 = vmatprep.subr.bf16.mxu0 0
  %223 = vmatpush1.bf16.msra.mxu0 %v213
  %224 = vmatprep.subr.bf16.mxu0 0
  %225 = vmatpush1.bf16.msra.mxu0 %v212
  %226 = vmatprep.subr.bf16.mxu0 0
  %227 = vmatpush1.bf16.msra.mxu0 %v211
  %228 = vmatprep.subr.bf16.mxu0 0
  %229 = vmatpush1.bf16.msra.mxu0 %v210
  %230 = vmatprep.subr.bf16.mxu0 0
  %231 = vmatpush1.bf16.msra.mxu0 %v209
  %232 = vmatprep.subr.bf16.mxu0 0
  %233 = vmatpush1.bf16.msra.mxu0 %v208
  %234 = vmatprep.subr.bf16.mxu0 0
  %235 = vmatpush1.bf16.msra.mxu0 %v207
  %236 = vmatprep.subr.bf16.mxu0 0
  %237 = vmatpush1.bf16.msra.mxu0 %v206
  %238 = vmatprep.subr.bf16.mxu0 0
  %239 = vmatpush2.bf16.msra.mxu0 0
  %240 = vmatprep.subr.bf16.mxu0 0
  %241 = vmatpush2.bf16.msra.mxu0 0
  %242 = vmatprep.subr.bf16.mxu0 0
  %243 = vmatpush2.bf16.msra.mxu0 0
  %244 = vmatprep.subr.bf16.mxu0 0
  %245 = vmatpush2.bf16.msra.mxu0 0
  %246 = vmatprep.subr.bf16.mxu0 0
  %247 = vmatpush2.bf16.msra.mxu0 0
  %248 = vmatprep.subr.bf16.mxu0 0
  %249 = vmatpush2.bf16.msra.mxu0 0
  %250 = vmatprep.subr.bf16.mxu0 0
  %251 = vmatpush2.bf16.msra.mxu0 0
  %252 = vmatprep.subr.bf16.mxu0 0
  %253 = vmatpush2.bf16.msra.mxu0 0
  %254 = vmatprep.mubr.bf16.mxu0 0
  %255 = vmatmul.mubr.bf16.gmra.mxu0 %v157
  %v256 = vpop.f32.mrf.mxu0
  %v257 = vadd.f32 0.0, %v256
  %v258 = vpop.f32.mrf.mxu0
  %v259 = vpop.f32.mrf.mxu0
  %v260 = vpop.f32.mrf.mxu0
  %261 = vdwg.mxu0
  %v278 = vunpack.c.l.b16 %v141
  %v279 = vunpack.c.l.b16 %v142
  %v280 = vunpack.c.l.b16 %v143
  %v281 = vunpack.c.l.b16 %v144
  %v282 = vunpack.c.l.b16 %v145
  %v283 = vunpack.c.l.b16 %v146
  %v284 = vunpack.c.l.b16 %v147
  %v285 = vunpack.c.l.b16 %v148
  %v286 = vunpack.c.l.b16 %v149
  %v287 = vunpack.c.l.b16 %v150
  %v288 = vunpack.c.l.b16 %v151
  %v289 = vunpack.c.l.b16 %v152
  %v290 = vunpack.c.l.b16 %v153
  %v291 = vunpack.c.l.b16 %v154
  %v292 = vunpack.c.l.b16 %v155
  %v293 = vunpack.c.l.b16 %v156
  %v294 = vpack.c.b16 %v279, %v278
  %v295 = vpack.c.b16 %v281, %v280
  %v296 = vpack.c.b16 %v283, %v282
  %v297 = vpack.c.b16 %v285, %v284
  %v298 = vpack.c.b16 %v287, %v286
  %v299 = vpack.c.b16 %v289, %v288
  %v300 = vpack.c.b16 %v291, %v290
  %v301 = vpack.c.b16 %v293, %v292
  %310 = vmatprep.subr.bf16.mxu0 0
  %311 = vmatpush1.bf16.msra.mxu0 %v301
  %312 = vmatprep.subr.bf16.mxu0 0
  %313 = vmatpush1.bf16.msra.mxu0 %v300
  %314 = vmatprep.subr.bf16.mxu0 0
  %315 = vmatpush1.bf16.msra.mxu0 %v299
  %316 = vmatprep.subr.bf16.mxu0 0
  %317 = vmatpush1.bf16.msra.mxu0 %v298
  %318 = vmatprep.subr.bf16.mxu0 0
  %319 = vmatpush1.bf16.msra.mxu0 %v297
  %320 = vmatprep.subr.bf16.mxu0 0
  %321 = vmatpush1.bf16.msra.mxu0 %v296
  %322 = vmatprep.subr.bf16.mxu0 0
  %323 = vmatpush1.bf16.msra.mxu0 %v295
  %324 = vmatprep.subr.bf16.mxu0 0
  %325 = vmatpush1.bf16.msra.mxu0 %v294
  %326 = vmatprep.subr.bf16.mxu0 0
  %327 = vmatpush2.bf16.msra.mxu0 0
  %328 = vmatprep.subr.bf16.mxu0 0
  %329 = vmatpush2.bf16.msra.mxu0 0
  %330 = vmatprep.subr.bf16.mxu0 0
  %331 = vmatpush2.bf16.msra.mxu0 0
  %332 = vmatprep.subr.bf16.mxu0 0
  %333 = vmatpush2.bf16.msra.mxu0 0
  %334 = vmatprep.subr.bf16.mxu0 0
  %335 = vmatpush2.bf16.msra.mxu0 0
  %336 = vmatprep.subr.bf16.mxu0 0
  %337 = vmatpush2.bf16.msra.mxu0 0
  %338 = vmatprep.subr.bf16.mxu0 0
  %339 = vmatpush2.bf16.msra.mxu0 0
  %340 = vmatprep.subr.bf16.mxu0 0
  %341 = vmatpush2.bf16.msra.mxu0 0
  %342 = vmatprep.mubr.bf16.mxu0 0
  %343 = vmatmul.mubr.bf16.gmra.mxu0 %v140
  %v344 = vpop.f32.mrf.mxu0
  %v345 = vadd.f32 %v257, %v344
  %v346 = vpop.f32.mrf.mxu0
  %v347 = vpop.f32.mrf.mxu0
  %v348 = vpop.f32.mrf.mxu0
  %349 = vdwg.mxu0
  %v350 = vld [vmem:[%s6] sm:$0x1]
  %v352 = vlaneseq
  %v353 = vshrl.u32 %v352, 7
  %v354 = vsub.s32 0, %v353
  %v355 = vrot.slane %v350, %v354
  %v357 = vadd.f32 %v345, %v355
  %358 = vst [vmem:[%s7] sm:$0xff] %v357
  // Predicated region
  $region30: #{bert_tfidf_classifier.1} parent=0 // pred_check
    _
  $region31: #{bert_tfidf_classifier.1} parent=0 // pred_check_branch
    %360 = sbr.rel (0) target = $region33
  $region32: #{bert_tfidf_classifier.1} parent=0 // pred_region
    _
  $region33: #{bert_tfidf_classifier.1} parent=0 // pred_fallthru
    _
  // Predicated region
  $region34: #{bert_tfidf_classifier.1} parent=0 // pred_check
    _
  $region35: #{bert_tfidf_classifier.1} parent=0 // pred_check_branch
    %362 = sbr.rel (0) target = $region37
  $region36: #{bert_tfidf_classifier.1} parent=0 // pred_region
    _
  $region37: #{bert_tfidf_classifier.1} parent=0 // pred_fallthru
    _

</llo_original>
